<compile_context>
chip_gen: v5e
topology: v5e:2x2
jax: 0.10.0
libtpu: 0.0.40
codegen_flags: <defaults>
</compile_context>

<pallas_src>
import math
import numpy as np
import jax
import jax.numpy as jnp
from jax import lax
from jax.experimental import pallas as pl
from jax.experimental.pallas import tpu as pltpu


# ---------------------------------------------------------------------------
# Deterministic parameter init: kaiser-windowed sinc low-pass filter
# (mirrors alias_free_torch.filter.kaiser_sinc_filter1d).
# ---------------------------------------------------------------------------
def kaiser_sinc_filter1d(cutoff, half_width, kernel_size):
    even = (kernel_size % 2 == 0)
    half_size = kernel_size // 2
    delta_f = 4.0 * half_width
    A = 2.285 * (half_size - 1) * math.pi * delta_f + 7.95
    if A > 50.0:
        beta = 0.1102 * (A - 8.7)
    elif A >= 21.0:
        beta = 0.5842 * (A - 21.0) ** 0.4 + 0.07886 * (A - 21.0)
    else:
        beta = 0.0
    window = np.kaiser(kernel_size, beta)
    if even:
        time = np.arange(-half_size, half_size) + 0.5
    else:
        time = np.arange(kernel_size) - half_size
    if cutoff == 0:
        return np.zeros(kernel_size, np.float64)
    filt = 2.0 * cutoff * window * np.sinc(2.0 * cutoff * time)
    filt = filt / filt.sum()
    return filt.astype(np.float64)


# ---------------------------------------------------------------------------
# Static (host-side) derivation of the polyphase taps.
#   Upsample:  u[s*i + r] = s * sum_d x_pad[i + d] * f_up[r + pad_left - s*d]
#   Downsample (replicate pad pl2): y[i] = sum_k f_dn[k] * a[clip(s*i+k-pl2)]
#              with s*i + k - pl2 = s*(i + m) + r, r = (k-pl2) % s, m = (k-pl2)//s
# ---------------------------------------------------------------------------
def _build_taps(up_ratio, down_ratio, up_kernel_size, down_kernel_size, f_up, f_dn):
    # TODO(synk): generalize the phase mapping for up_ratio != down_ratio.
    assert up_ratio == down_ratio, "phase mapping assumes equal up/down ratios"
    s = up_ratio
    K = up_kernel_size
    pad = K // s - 1                          # UpSample1d.pad (replicate pad of x)
    pad_left = pad * s + (K - s) // 2         # UpSample1d.pad_left (trim after convT)
    pad_right = pad * s + (K - s + 1) // 2
    # transposed-conv output trimmed to exactly s*T samples
    assert (2 * pad - 1) * s + K - pad_left - pad_right == 0

    taps_up = []
    for r in range(s):
        d_lo = -((-(r + pad_left - K + 1)) // s)   # ceil((r + pad_left - K + 1)/s)
        d_hi = (r + pad_left) // s
        assert 0 <= d_lo and d_hi <= 2 * pad, "replicate pad too small for tap window"
        taps_up.append(tuple(
            (d, float(s * f_up[r + pad_left - s * d])) for d in range(d_lo, d_hi + 1)))

    K2 = down_kernel_size
    pl2 = K2 // 2 - (1 if K2 % 2 == 0 else 0)   # LowPassFilter1d.pad_left
    taps_dn = []
    for k in range(K2):
        off = k - pl2
        taps_dn.append((off % s, off // s, float(f_dn[k])))
    ms = [m for (_, m, _) in taps_dn]
    ext_l = max(0, -min(ms))
    ext_r = max(0, max(ms))
    return tuple(taps_up), tuple(taps_dn), pad, ext_l, ext_r


# ---------------------------------------------------------------------------
# The fused Pallas kernel: upsample -> activation -> downsample, streamed
# per polyphase component.  Column j of the phase arrays corresponds to
# upsampled position p = j - ext_l; positions outside [0, T) are patched with
# the replicate-edge values a[0] / a[s*T - 1] via iota + where.
# ---------------------------------------------------------------------------
def _make_kernel(taps_up, taps_dn, T, Tl, s, ext_l, ext_r, Wp, act_fn):
    dn_by_phase = [[] for _ in range(s)]
    for r, m, c in taps_dn:
        dn_by_phase[r].append((m, c))

    def kernel(xin_ref, o_ref):
        xin = xin_ref[...].astype(jnp.float32)        # (rows, Win_aligned)
        rows = xin.shape[0]

        # position index p = column - ext_l (hoisted; reused by both phases)
        pcol = lax.broadcasted_iota(jnp.int32, (rows, Wp), 1)

        # replicate-edge boundary values of a = act(upsample(x)):
        #   left  = a[0]       = phase 0,   position 0
        #   right = a[s*T - 1] = phase s-1, position T-1
        def phase_col(r, p):
            d0, c0 = taps_up[r][0]
            acc = c0 * xin[:, ext_l + p + d0: ext_l + p + d0 + 1]
            for d, c in taps_up[r][1:]:
                j = ext_l + p + d
                acc = acc + c * xin[:, j:j + 1]
            return act_fn(acc)

        left_val = phase_col(0, 0)                    # (rows, 1)
        right_val = phase_col(s - 1, T - 1)           # (rows, 1)

        y = jnp.zeros((rows, Tl), jnp.float32)
        for r in range(s):
            # upsample phase r over extended positions [-ext_l, Tl + ext_r)
            d0, c0 = taps_up[r][0]
            u = c0 * xin[:, d0:d0 + Wp]
            for d, c in taps_up[r][1:]:
                u = u + c * xin[:, d:d + Wp]
            a = act_fn(u)
            # patch out-of-range positions with the replicate-edge values
            a = jnp.where(pcol < ext_l, left_val, a)
            a = jnp.where(pcol >= ext_l + T, right_val, a)
            # downsample taps reading this phase: accumulate and discard `a`
            for m, c in dn_by_phase[r]:
                st = ext_l + m
                y = y + c * a[:, st:st + Tl]

        o_ref[...] = y.astype(o_ref.dtype)

    return kernel


# ---------------------------------------------------------------------------
# Wrapper (glue: parameter init, replicate padding, lane alignment, tiling).
# ---------------------------------------------------------------------------
def activation1d_pallas(x, *, up_ratio=2, down_ratio=2,
                        up_kernel_size=12, down_kernel_size=12,
                        act=None, block_rows=512,
                        vmem_budget_bytes=16 * 1024 * 1024):
    if act is None:
        act = lambda v: jnp.where(v >= 0, v, 0.2 * v)      # LeakyReLU(0.2)
    B, C, T = x.shape
    s = up_ratio
    f_up = kaiser_sinc_filter1d(0.5 / up_ratio, 0.6 / up_ratio, up_kernel_size)
    f_dn = kaiser_sinc_filter1d(0.5 / down_ratio, 0.6 / down_ratio, down_kernel_size)
    taps_up, taps_dn, pad, ext_l, ext_r = _build_taps(
        up_ratio, down_ratio, up_kernel_size, down_kernel_size, f_up, f_dn)

    K2 = down_kernel_size
    pl2 = K2 // 2 - (1 if K2 % 2 == 0 else 0)
    pr2 = K2 // 2
    assert (s * T + pl2 + pr2 - K2) // down_ratio + 1 == T  # output length == T

    LANE, SUB = 128, 8
    Tl = pl.cdiv(T, LANE) * LANE                  # lane-aligned output width
    Wp = ext_l + Tl + ext_r                       # extended phase width
    Win_needed = Wp + 2 * pad                     # columns the kernel reads
    Win = pl.cdiv(Win_needed, LANE) * LANE        # lane-aligned input width

    # glue: single replicate-pad of the time axis (extra right cols: don't-care)
    left_pad = pad + ext_l
    right_pad = Win - T - left_pad
    xp = jnp.pad(x, ((0, 0), (0, 0), (left_pad, right_pad)), mode='edge')
    R = B * C
    xr = xp.reshape(R, Win)

    # row tiling: big tiles, capped by a VMEM budget and by the real row count
    bytes_per_row = 4 * (3 * Win + 3 * Wp + 3 * Tl)       # rough live-set estimate
    br_cap = max(SUB, (vmem_budget_bytes // bytes_per_row) // SUB * SUB)
    BR = min(block_rows, br_cap, pl.cdiv(R, SUB) * SUB)
    BR = max(SUB, (BR // SUB) * SUB)
    n_blocks = pl.cdiv(R, BR)
    Rp = n_blocks * BR
    if Rp != R:
        xr = jnp.pad(xr, ((0, Rp - R), (0, 0)))

    kernel = _make_kernel(taps_up, taps_dn, T, Tl, s, ext_l, ext_r, Wp, act)
    out = pl.pallas_call(
        kernel,
        out_shape=jax.ShapeDtypeStruct((Rp, Tl), x.dtype),
        grid=(n_blocks,),
        in_specs=[pl.BlockSpec((BR, Win), lambda i: (i, 0))],
        out_specs=pl.BlockSpec((BR, Tl), lambda i: (i, 0)),
        compiler_params=pltpu.CompilerParams(
            dimension_semantics=("parallel",),
            vmem_limit_bytes=48 * 1024 * 1024),
    )(xr)
    return out[:R, :T].reshape(B, C, T)


# ---------------------------------------------------------------------------
# Independent numpy reference mirroring the PyTorch ops literally.
# ---------------------------------------------------------------------------
def _numpy_reference(x, up_ratio, down_ratio, up_kernel_size, down_kernel_size, act_np):
    B, C, T = x.shape
    s = up_ratio
    f_up = kaiser_sinc_filter1d(0.5 / up_ratio, 0.6 / up_ratio, up_kernel_size)
    f_dn = kaiser_sinc_filter1d(0.5 / down_ratio, 0.6 / down_ratio, down_kernel_size)
    K = up_kernel_size
    pad = K // s - 1
    pad_left = pad * s + (K - s) // 2
    pad_right = pad * s + (K - s + 1) // 2
    xp = np.pad(x, ((0, 0), (0, 0), (pad, pad)), mode='edge')
    Tp = xp.shape[-1]
    Lt = (Tp - 1) * s + K
    y = np.zeros((B, C, Lt))
    for t in range(Lt):                 # conv_transpose1d (grouped, stride=s)
        for j in range(Tp):
            k = t - s * j
            if 0 <= k < K:
                y[..., t] += xp[..., j] * f_up[k]
    u = s * y[..., pad_left:Lt - pad_right]
    a = act_np(u)
    K2 = down_kernel_size
    s2 = down_ratio
    pl2 = K2 // 2 - (1 if K2 % 2 == 0 else 0)
    pr2 = K2 // 2
    ap = np.pad(a, ((0, 0), (0, 0), (pl2, pr2)), mode='edge')
    T_out = (ap.shape[-1] - K2) // s2 + 1
    out = np.zeros((B, C, T_out))
    for i in range(T_out):              # conv1d (grouped, stride=s2)
        for k in range(K2):
            out[..., i] += ap[..., s2 * i + k] * f_dn[k]
    return out


if __name__ == "__main__":
    B, C, T = 2, 4, 16
    key = jax.random.PRNGKey(0)
    x = jax.random.normal(key, (B, C, T), dtype=jnp.float32)

    out = activation1d_pallas(x)
    out = jax.block_until_ready(out)
    assert out.shape == (B, C, T) and out.dtype == x.dtype

    ref = _numpy_reference(np.asarray(x).astype(np.float64), 2, 2, 12, 12,
                           lambda v: np.where(v >= 0, v, 0.2 * v))
    np.testing.assert_allclose(np.asarray(out), ref, rtol=1e-4, atol=1e-4)
    print("KERNEL_OK")
</pallas_src>

<mosaic_0001>
module attributes {stable_mosaic.version = 11 : i64} {
  func.func @kernel(%arg0: i32, %arg1: memref<8x256xf32, #tpu.memory_space<vmem>>, %arg2: memref<8x128xf32, #tpu.memory_space<vmem>>) attributes {dimension_semantics = [#tpu.dimension_semantics<parallel>], iteration_bounds = array<i64: 1>, scalar_prefetch = 0 : i64, scratch_operands = 0 : i64, tpu.core_type = #tpu.core_type<tc>, window_params = [{transform_indices = @transform_0, window_bounds = array<i64: 8, 256>}, {transform_indices = @transform_1, window_bounds = array<i64: 8, 128>}]} {
    %c0 = arith.constant 0 : index
    %c0_0 = arith.constant 0 : index
    %0 = vector.load %arg1[%c0, %c0_0] : memref<8x256xf32, #tpu.memory_space<vmem>>, vector<8x256xf32>
    %1 = tpu.iota {dimensions = array<i32: 1>} : vector<8x134xi32>
    %2 = vector.extract_strided_slice %0 {offsets = [0, 5], sizes = [8, 1], strides = [1, 1]} : vector<8x256xf32> to vector<8x1xf32>
    %cst = arith.constant 0.00405793311 : f32
    %3 = vector.broadcast %cst : f32 to vector<8x1xf32>
    %4 = arith.mulf %3, %2 : vector<8x1xf32>
    %5 = vector.extract_strided_slice %0 {offsets = [0, 6], sizes = [8, 1], strides = [1, 1]} : vector<8x256xf32> to vector<8x1xf32>
    %cst_1 = arith.constant -0.0510869287 : f32
    %6 = vector.broadcast %cst_1 : f32 to vector<8x1xf32>
    %7 = arith.mulf %6, %5 : vector<8x1xf32>
    %8 = arith.addf %4, %7 : vector<8x1xf32>
    %9 = vector.extract_strided_slice %0 {offsets = [0, 7], sizes = [8, 1], strides = [1, 1]} : vector<8x256xf32> to vector<8x1xf32>
    %cst_2 = arith.constant 0.257145226 : f32
    %10 = vector.broadcast %cst_2 : f32 to vector<8x1xf32>
    %11 = arith.mulf %10, %9 : vector<8x1xf32>
    %12 = arith.addf %8, %11 : vector<8x1xf32>
    %13 = vector.extract_strided_slice %0 {offsets = [0, 8], sizes = [8, 1], strides = [1, 1]} : vector<8x256xf32> to vector<8x1xf32>
    %cst_3 = arith.constant 0.886419594 : f32
    %14 = vector.broadcast %cst_3 : f32 to vector<8x1xf32>
    %15 = arith.mulf %14, %13 : vector<8x1xf32>
    %16 = arith.addf %12, %15 : vector<8x1xf32>
    %17 = vector.extract_strided_slice %0 {offsets = [0, 9], sizes = [8, 1], strides = [1, 1]} : vector<8x256xf32> to vector<8x1xf32>
    %cst_4 = arith.constant -0.115314752 : f32
    %18 = vector.broadcast %cst_4 : f32 to vector<8x1xf32>
    %19 = arith.mulf %18, %17 : vector<8x1xf32>
    %20 = arith.addf %16, %19 : vector<8x1xf32>
    %21 = vector.extract_strided_slice %0 {offsets = [0, 10], sizes = [8, 1], strides = [1, 1]} : vector<8x256xf32> to vector<8x1xf32>
    %cst_5 = arith.constant 0.0187789276 : f32
    %22 = vector.broadcast %cst_5 : f32 to vector<8x1xf32>
    %23 = arith.mulf %22, %21 : vector<8x1xf32>
    %24 = arith.addf %20, %23 : vector<8x1xf32>
    %cst_6 = arith.constant 0.000000e+00 : f32
    %25 = vector.broadcast %cst_6 : f32 to vector<8x1xf32>
    %26 = arith.cmpf oge, %24, %25 : vector<8x1xf32>
    %cst_7 = arith.constant 2.000000e-01 : f32
    %27 = vector.broadcast %cst_7 : f32 to vector<8x1xf32>
    %28 = arith.mulf %27, %24 : vector<8x1xf32>
    %29 = arith.select %26, %24, %28 : vector<8x1xi1>, vector<8x1xf32>
    %30 = vector.extract_strided_slice %0 {offsets = [0, 21], sizes = [8, 1], strides = [1, 1]} : vector<8x256xf32> to vector<8x1xf32>
    %cst_8 = arith.constant 0.0187789276 : f32
    %31 = vector.broadcast %cst_8 : f32 to vector<8x1xf32>
    %32 = arith.mulf %31, %30 : vector<8x1xf32>
    %33 = vector.extract_strided_slice %0 {offsets = [0, 22], sizes = [8, 1], strides = [1, 1]} : vector<8x256xf32> to vector<8x1xf32>
    %cst_9 = arith.constant -0.115314752 : f32
    %34 = vector.broadcast %cst_9 : f32 to vector<8x1xf32>
    %35 = arith.mulf %34, %33 : vector<8x1xf32>
    %36 = arith.addf %32, %35 : vector<8x1xf32>
    %37 = vector.extract_strided_slice %0 {offsets = [0, 23], sizes = [8, 1], strides = [1, 1]} : vector<8x256xf32> to vector<8x1xf32>
    %cst_10 = arith.constant 0.886419594 : f32
    %38 = vector.broadcast %cst_10 : f32 to vector<8x1xf32>
    %39 = arith.mulf %38, %37 : vector<8x1xf32>
    %40 = arith.addf %36, %39 : vector<8x1xf32>
    %41 = vector.extract_strided_slice %0 {offsets = [0, 24], sizes = [8, 1], strides = [1, 1]} : vector<8x256xf32> to vector<8x1xf32>
    %cst_11 = arith.constant 0.257145226 : f32
    %42 = vector.broadcast %cst_11 : f32 to vector<8x1xf32>
    %43 = arith.mulf %42, %41 : vector<8x1xf32>
    %44 = arith.addf %40, %43 : vector<8x1xf32>
    %45 = vector.extract_strided_slice %0 {offsets = [0, 25], sizes = [8, 1], strides = [1, 1]} : vector<8x256xf32> to vector<8x1xf32>
    %cst_12 = arith.constant -0.0510869287 : f32
    %46 = vector.broadcast %cst_12 : f32 to vector<8x1xf32>
    %47 = arith.mulf %46, %45 : vector<8x1xf32>
    %48 = arith.addf %44, %47 : vector<8x1xf32>
    %49 = vector.extract_strided_slice %0 {offsets = [0, 26], sizes = [8, 1], strides = [1, 1]} : vector<8x256xf32> to vector<8x1xf32>
    %cst_13 = arith.constant 0.00405793311 : f32
    %50 = vector.broadcast %cst_13 : f32 to vector<8x1xf32>
    %51 = arith.mulf %50, %49 : vector<8x1xf32>
    %52 = arith.addf %48, %51 : vector<8x1xf32>
    %cst_14 = arith.constant 0.000000e+00 : f32
    %53 = vector.broadcast %cst_14 : f32 to vector<8x1xf32>
    %54 = arith.cmpf oge, %52, %53 : vector<8x1xf32>
    %cst_15 = arith.constant 2.000000e-01 : f32
    %55 = vector.broadcast %cst_15 : f32 to vector<8x1xf32>
    %56 = arith.mulf %55, %52 : vector<8x1xf32>
    %57 = arith.select %54, %52, %56 : vector<8x1xi1>, vector<8x1xf32>
    %cst_16 = arith.constant 0.000000e+00 : f32
    %58 = vector.broadcast %cst_16 : f32 to vector<8x128xf32>
    %59 = vector.extract_strided_slice %0 {offsets = [0, 2], sizes = [8, 134], strides = [1, 1]} : vector<8x256xf32> to vector<8x134xf32>
    %cst_17 = arith.constant 0.00405793311 : f32
    %60 = vector.broadcast %cst_17 : f32 to vector<8x134xf32>
    %61 = arith.mulf %60, %59 : vector<8x134xf32>
    %62 = vector.extract_strided_slice %0 {offsets = [0, 3], sizes = [8, 134], strides = [1, 1]} : vector<8x256xf32> to vector<8x134xf32>
    %cst_18 = arith.constant -0.0510869287 : f32
    %63 = vector.broadcast %cst_18 : f32 to vector<8x134xf32>
    %64 = arith.mulf %63, %62 : vector<8x134xf32>
    %65 = arith.addf %61, %64 : vector<8x134xf32>
    %66 = vector.extract_strided_slice %0 {offsets = [0, 4], sizes = [8, 134], strides = [1, 1]} : vector<8x256xf32> to vector<8x134xf32>
    %cst_19 = arith.constant 0.257145226 : f32
    %67 = vector.broadcast %cst_19 : f32 to vector<8x134xf32>
    %68 = arith.mulf %67, %66 : vector<8x134xf32>
    %69 = arith.addf %65, %68 : vector<8x134xf32>
    %70 = vector.extract_strided_slice %0 {offsets = [0, 5], sizes = [8, 134], strides = [1, 1]} : vector<8x256xf32> to vector<8x134xf32>
    %cst_20 = arith.constant 0.886419594 : f32
    %71 = vector.broadcast %cst_20 : f32 to vector<8x134xf32>
    %72 = arith.mulf %71, %70 : vector<8x134xf32>
    %73 = arith.addf %69, %72 : vector<8x134xf32>
    %74 = vector.extract_strided_slice %0 {offsets = [0, 6], sizes = [8, 134], strides = [1, 1]} : vector<8x256xf32> to vector<8x134xf32>
    %cst_21 = arith.constant -0.115314752 : f32
    %75 = vector.broadcast %cst_21 : f32 to vector<8x134xf32>
    %76 = arith.mulf %75, %74 : vector<8x134xf32>
    %77 = arith.addf %73, %76 : vector<8x134xf32>
    %78 = vector.extract_strided_slice %0 {offsets = [0, 7], sizes = [8, 134], strides = [1, 1]} : vector<8x256xf32> to vector<8x134xf32>
    %cst_22 = arith.constant 0.0187789276 : f32
    %79 = vector.broadcast %cst_22 : f32 to vector<8x134xf32>
    %80 = arith.mulf %79, %78 : vector<8x134xf32>
    %81 = arith.addf %77, %80 : vector<8x134xf32>
    %cst_23 = arith.constant 0.000000e+00 : f32
    %82 = vector.broadcast %cst_23 : f32 to vector<8x134xf32>
    %83 = arith.cmpf oge, %81, %82 : vector<8x134xf32>
    %cst_24 = arith.constant 2.000000e-01 : f32
    %84 = vector.broadcast %cst_24 : f32 to vector<8x134xf32>
    %85 = arith.mulf %84, %81 : vector<8x134xf32>
    %86 = arith.select %83, %81, %85 : vector<8x134xi1>, vector<8x134xf32>
    %c3_i32 = arith.constant 3 : i32
    %87 = vector.broadcast %c3_i32 : i32 to vector<8x134xi32>
    %88 = arith.cmpi slt, %1, %87 : vector<8x134xi32>
    %89 = vector.shape_cast %29 : vector<8x1xf32> to vector<8x1xf32>
    %90 = vector.broadcast %89 : vector<8x1xf32> to vector<8x134xf32>
    %91 = arith.select %88, %90, %86 : vector<8x134xi1>, vector<8x134xf32>
    %c19_i32 = arith.constant 19 : i32
    %92 = vector.broadcast %c19_i32 : i32 to vector<8x134xi32>
    %93 = arith.cmpi sge, %1, %92 : vector<8x134xi32>
    %94 = vector.shape_cast %57 : vector<8x1xf32> to vector<8x1xf32>
    %95 = vector.broadcast %94 : vector<8x1xf32> to vector<8x134xf32>
    %96 = arith.select %93, %95, %91 : vector<8x134xi1>, vector<8x134xf32>
    %97 = vector.extract_strided_slice %96 {offsets = [0, 1], sizes = [8, 128], strides = [1, 1]} : vector<8x134xf32> to vector<8x128xf32>
    %cst_25 = arith.constant 0.00938946381 : f32
    %98 = vector.broadcast %cst_25 : f32 to vector<8x128xf32>
    %99 = arith.mulf %98, %97 : vector<8x128xf32>
    %100 = arith.addf %58, %99 : vector<8x128xf32>
    %101 = vector.extract_strided_slice %96 {offsets = [0, 2], sizes = [8, 128], strides = [1, 1]} : vector<8x134xf32> to vector<8x128xf32>
    %cst_26 = arith.constant -0.0576573759 : f32
    %102 = vector.broadcast %cst_26 : f32 to vector<8x128xf32>
    %103 = arith.mulf %102, %101 : vector<8x128xf32>
    %104 = arith.addf %100, %103 : vector<8x128xf32>
    %105 = vector.extract_strided_slice %96 {offsets = [0, 3], sizes = [8, 128], strides = [1, 1]} : vector<8x134xf32> to vector<8x128xf32>
    %cst_27 = arith.constant 0.443209797 : f32
    %106 = vector.broadcast %cst_27 : f32 to vector<8x128xf32>
    %107 = arith.mulf %106, %105 : vector<8x128xf32>
    %108 = arith.addf %104, %107 : vector<8x128xf32>
    %109 = vector.extract_strided_slice %96 {offsets = [0, 4], sizes = [8, 128], strides = [1, 1]} : vector<8x134xf32> to vector<8x128xf32>
    %cst_28 = arith.constant 0.128572613 : f32
    %110 = vector.broadcast %cst_28 : f32 to vector<8x128xf32>
    %111 = arith.mulf %110, %109 : vector<8x128xf32>
    %112 = arith.addf %108, %111 : vector<8x128xf32>
    %113 = vector.extract_strided_slice %96 {offsets = [0, 5], sizes = [8, 128], strides = [1, 1]} : vector<8x134xf32> to vector<8x128xf32>
    %cst_29 = arith.constant -0.0255434643 : f32
    %114 = vector.broadcast %cst_29 : f32 to vector<8x128xf32>
    %115 = arith.mulf %114, %113 : vector<8x128xf32>
    %116 = arith.addf %112, %115 : vector<8x128xf32>
    %117 = vector.extract_strided_slice %96 {offsets = [0, 6], sizes = [8, 128], strides = [1, 1]} : vector<8x134xf32> to vector<8x128xf32>
    %cst_30 = arith.constant 0.00202896656 : f32
    %118 = vector.broadcast %cst_30 : f32 to vector<8x128xf32>
    %119 = arith.mulf %118, %117 : vector<8x128xf32>
    %120 = arith.addf %116, %119 : vector<8x128xf32>
    %121 = vector.extract_strided_slice %0 {offsets = [0, 3], sizes = [8, 134], strides = [1, 1]} : vector<8x256xf32> to vector<8x134xf32>
    %cst_31 = arith.constant 0.0187789276 : f32
    %122 = vector.broadcast %cst_31 : f32 to vector<8x134xf32>
    %123 = arith.mulf %122, %121 : vector<8x134xf32>
    %124 = vector.extract_strided_slice %0 {offsets = [0, 4], sizes = [8, 134], strides = [1, 1]} : vector<8x256xf32> to vector<8x134xf32>
    %cst_32 = arith.constant -0.115314752 : f32
    %125 = vector.broadcast %cst_32 : f32 to vector<8x134xf32>
    %126 = arith.mulf %125, %124 : vector<8x134xf32>
    %127 = arith.addf %123, %126 : vector<8x134xf32>
    %128 = vector.extract_strided_slice %0 {offsets = [0, 5], sizes = [8, 134], strides = [1, 1]} : vector<8x256xf32> to vector<8x134xf32>
    %cst_33 = arith.constant 0.886419594 : f32
    %129 = vector.broadcast %cst_33 : f32 to vector<8x134xf32>
    %130 = arith.mulf %129, %128 : vector<8x134xf32>
    %131 = arith.addf %127, %130 : vector<8x134xf32>
    %132 = vector.extract_strided_slice %0 {offsets = [0, 6], sizes = [8, 134], strides = [1, 1]} : vector<8x256xf32> to vector<8x134xf32>
    %cst_34 = arith.constant 0.257145226 : f32
    %133 = vector.broadcast %cst_34 : f32 to vector<8x134xf32>
    %134 = arith.mulf %133, %132 : vector<8x134xf32>
    %135 = arith.addf %131, %134 : vector<8x134xf32>
    %136 = vector.extract_strided_slice %0 {offsets = [0, 7], sizes = [8, 134], strides = [1, 1]} : vector<8x256xf32> to vector<8x134xf32>
    %cst_35 = arith.constant -0.0510869287 : f32
    %137 = vector.broadcast %cst_35 : f32 to vector<8x134xf32>
    %138 = arith.mulf %137, %136 : vector<8x134xf32>
    %139 = arith.addf %135, %138 : vector<8x134xf32>
    %140 = vector.extract_strided_slice %0 {offsets = [0, 8], sizes = [8, 134], strides = [1, 1]} : vector<8x256xf32> to vector<8x134xf32>
    %cst_36 = arith.constant 0.00405793311 : f32
    %141 = vector.broadcast %cst_36 : f32 to vector<8x134xf32>
    %142 = arith.mulf %141, %140 : vector<8x134xf32>
    %143 = arith.addf %139, %142 : vector<8x134xf32>
    %cst_37 = arith.constant 0.000000e+00 : f32
    %144 = vector.broadcast %cst_37 : f32 to vector<8x134xf32>
    %145 = arith.cmpf oge, %143, %144 : vector<8x134xf32>
    %cst_38 = arith.constant 2.000000e-01 : f32
    %146 = vector.broadcast %cst_38 : f32 to vector<8x134xf32>
    %147 = arith.mulf %146, %143 : vector<8x134xf32>
    %148 = arith.select %145, %143, %147 : vector<8x134xi1>, vector<8x134xf32>
    %c3_i32_39 = arith.constant 3 : i32
    %149 = vector.broadcast %c3_i32_39 : i32 to vector<8x134xi32>
    %150 = arith.cmpi slt, %1, %149 : vector<8x134xi32>
    %151 = vector.shape_cast %29 : vector<8x1xf32> to vector<8x1xf32>
    %152 = vector.broadcast %151 : vector<8x1xf32> to vector<8x134xf32>
    %153 = arith.select %150, %152, %148 : vector<8x134xi1>, vector<8x134xf32>
    %c19_i32_40 = arith.constant 19 : i32
    %154 = vector.broadcast %c19_i32_40 : i32 to vector<8x134xi32>
    %155 = arith.cmpi sge, %1, %154 : vector<8x134xi32>
    %156 = vector.shape_cast %57 : vector<8x1xf32> to vector<8x1xf32>
    %157 = vector.broadcast %156 : vector<8x1xf32> to vector<8x134xf32>
    %158 = arith.select %155, %157, %153 : vector<8x134xi1>, vector<8x134xf32>
    %159 = vector.extract_strided_slice %158 {offsets = [0, 0], sizes = [8, 128], strides = [1, 1]} : vector<8x134xf32> to vector<8x128xf32>
    %cst_41 = arith.constant 0.00202896656 : f32
    %160 = vector.broadcast %cst_41 : f32 to vector<8x128xf32>
    %161 = arith.mulf %160, %159 : vector<8x128xf32>
    %162 = arith.addf %120, %161 : vector<8x128xf32>
    %163 = vector.extract_strided_slice %158 {offsets = [0, 1], sizes = [8, 128], strides = [1, 1]} : vector<8x134xf32> to vector<8x128xf32>
    %cst_42 = arith.constant -0.0255434643 : f32
    %164 = vector.broadcast %cst_42 : f32 to vector<8x128xf32>
    %165 = arith.mulf %164, %163 : vector<8x128xf32>
    %166 = arith.addf %162, %165 : vector<8x128xf32>
    %167 = vector.extract_strided_slice %158 {offsets = [0, 2], sizes = [8, 128], strides = [1, 1]} : vector<8x134xf32> to vector<8x128xf32>
    %cst_43 = arith.constant 0.128572613 : f32
    %168 = vector.broadcast %cst_43 : f32 to vector<8x128xf32>
    %169 = arith.mulf %168, %167 : vector<8x128xf32>
    %170 = arith.addf %166, %169 : vector<8x128xf32>
    %171 = vector.extract_strided_slice %158 {offsets = [0, 3], sizes = [8, 128], strides = [1, 1]} : vector<8x134xf32> to vector<8x128xf32>
    %cst_44 = arith.constant 0.443209797 : f32
    %172 = vector.broadcast %cst_44 : f32 to vector<8x128xf32>
    %173 = arith.mulf %172, %171 : vector<8x128xf32>
    %174 = arith.addf %170, %173 : vector<8x128xf32>
    %175 = vector.extract_strided_slice %158 {offsets = [0, 4], sizes = [8, 128], strides = [1, 1]} : vector<8x134xf32> to vector<8x128xf32>
    %cst_45 = arith.constant -0.0576573759 : f32
    %176 = vector.broadcast %cst_45 : f32 to vector<8x128xf32>
    %177 = arith.mulf %176, %175 : vector<8x128xf32>
    %178 = arith.addf %174, %177 : vector<8x128xf32>
    %179 = vector.extract_strided_slice %158 {offsets = [0, 5], sizes = [8, 128], strides = [1, 1]} : vector<8x134xf32> to vector<8x128xf32>
    %cst_46 = arith.constant 0.00938946381 : f32
    %180 = vector.broadcast %cst_46 : f32 to vector<8x128xf32>
    %181 = arith.mulf %180, %179 : vector<8x128xf32>
    %182 = arith.addf %178, %181 : vector<8x128xf32>
    %c0_47 = arith.constant 0 : index
    %c0_48 = arith.constant 0 : index
    %183 = vector.load %arg2[%c0_47, %c0_48] : memref<8x128xf32, #tpu.memory_space<vmem>>, vector<8x128xf32>
    tpu.vector_store %arg2[%c0_47, %c0_48], %182 {strides = array<i32>} : memref<8x128xf32, #tpu.memory_space<vmem>>, vector<8x128xf32>,
    return
  }
  func.func @transform_0(%arg0: i32) -> (i32, i32) {
    %c0_i32 = arith.constant 0 : i32
    %c0_i32_0 = arith.constant 0 : i32
    return %arg0, %c0_i32 : i32, i32
  }
  func.func @transform_1(%arg0: i32) -> (i32, i32) {
    %c0_i32 = arith.constant 0 : i32
    %c0_i32_0 = arith.constant 0 : i32
    return %arg0, %c0_i32 : i32, i32
  }
}

</mosaic_0001>

<llo_original>
// kernel: tpu_custom_call.1
$region0: #{tpu_custom_call.1}
  #allocation0 [shape = 'u32[]', space=smem, size = 0x4, offset = 0x4, fixed_abs, tag = 'smem constant byte address 0x4 - core index']
  #allocation1 [shape = 'u32[72,128]{1,0:T(1,128)}', space=vmem, size = 0x9000, scoped, tag = 'internal scratch']
  %s0 = inlined_call_operand.hbm [shape: f32[8,256], index: 0, kind: input, shape index: {}]
  %s1 = inlined_call_operand.hbm [shape: f32[8,128], index: 1, kind: output, shape index: {}]
  %s2 = sld [smem:[#allocation0]]
  $region18: #{tpu_custom_call.1} parent=0
    _
  %s4 = ssub.s32 1, %s2
  %s5 = scalar_select 0, %s4, %s2
  $region1: #{tpu_custom_call.1} parent=0
    #allocation2 [shape = 'u8[8192]{0}', space=vmem, size = 0x2000, scoped, tag = 'input window, operand 0, single buffered']
    #allocation3 [shape = 's32[1]{0}', space=sflag, size = 0x4, scoped, tag = 'scoped memory for tpu_custom_call.1']
    #allocation4 [shape = 's32[1]{0}', space=sflag, size = 0x4, scoped, tag = 'scoped memory for tpu_custom_call.1']
    #allocation5 [shape = 'u8[4096]{0}', space=vmem, size = 0x1000, scoped, tag = 'output window, operand 0, single buffered']
    %6 = vsyncpa [#allocation3], 0
    %7 = vsyncpa [#allocation4], 0
    // Predicated region
    $region2: #{tpu_custom_call.1} parent=1 // pred_check
      _
    $region3: #{tpu_custom_call.1} parent=1 // pred_check_branch
      %9 = sbr.rel (0) target = $region5
    $region4: #{tpu_custom_call.1} parent=1 // pred_region
      %11 = vsyncadd [#allocation3], 0
      %s13 = sshll.u32 %s0, 4
      %s14 = int_to_ptr.hbm [resolvable:$true] %s13
      %s15 = sshll.u32 [#allocation2], 4
      %s16 = int_to_ptr.vmem [resolvable:$true] %s15
      %18 = dma.hbm_to_vmem [thread:$0]  %s14, 256, %s16, [#allocation3]
    $region5: #{tpu_custom_call.1} parent=1 // pred_fallthru
      _
    // Predicated region
    $region6: #{tpu_custom_call.1} parent=1 // pred_check
      _
    $region7: #{tpu_custom_call.1} parent=1 // pred_check_branch
      %20 = sbr.rel (0) target = $region9
    $region8: #{tpu_custom_call.1} parent=1 // pred_region
      %22 = dma.done [#allocation3], 256
    $region9: #{tpu_custom_call.1} parent=1 // pred_fallthru
      _
    %v23 = vld [vmem:[#allocation2] sm:$0xff]
    %v24 = vld [vmem:[#allocation2 + $0x8] sm:$0xff]
    %v25 = vlaneseq
    %v26 = vand.u32 %v25, 127
    %v27 = vadd.s32 %v26, 128
    %v28 = vmul.f32 %v23, 0.004057933
    %v29 = vmul.f32 %v23, -0.05108693
    %31 = vrot.lane.b32.xlu0 %v29, 127
    %v32 = vpop.permute.xlu0 %31
    %v34 = vadd.f32 %v28, %v32
    %v35 = vmul.f32 %v23, 0.25714523
    %37 = vrot.lane.b32.xlu0 %v35, 126
    %v38 = vpop.permute.xlu0 %37
    %v40 = vadd.f32 %v34, %v38
    %v41 = vmul.f32 %v23, 0.8864196
    %43 = vrot.lane.b32.xlu0 %v41, 125
    %v44 = vpop.permute.xlu0 %43
    %v46 = vadd.f32 %v40, %v44
    %v47 = vmul.f32 %v23, -0.11531475
    %49 = vrot.lane.b32.xlu0 %v47, 124
    %v50 = vpop.permute.xlu0 %49
    %v52 = vadd.f32 %v46, %v50
    %v53 = vmul.f32 %v23, 0.018778928
    %55 = vrot.lane.b32.xlu0 %v53, 123
    %v56 = vpop.permute.xlu0 %55
    %v58 = vadd.f32 %v52, %v56
    %vm59 = vcmp.ge.f32.partialorder %v58, 0.0
    %v60 = vmul.f32 %v58, 0.2
    %v61 = vsel %vm59, %v58, %v60
    %62 = vrot.lane.b32.xlu0 %v47, 127
    %v63 = vpop.permute.xlu0 %62
    %v65 = vadd.f32 %v53, %v63
    %66 = vrot.lane.b32.xlu0 %v41, 126
    %v67 = vpop.permute.xlu0 %66
    %v69 = vadd.f32 %v65, %v67
    %70 = vrot.lane.b32.xlu0 %v35, 125
    %v71 = vpop.permute.xlu0 %70
    %v73 = vadd.f32 %v69, %v71
    %74 = vrot.lane.b32.xlu0 %v29, 124
    %v75 = vpop.permute.xlu0 %74
    %v77 = vadd.f32 %v73, %v75
    %79 = vrot.lane.b32.xlu0 %v28, 123
    %v80 = vpop.permute.xlu0 %79
    %v82 = vadd.f32 %v77, %v80
    %vm83 = vcmp.ge.f32.partialorder %v82, 0.0
    %v84 = vmul.f32 %v82, 0.2
    %v85 = vsel %vm83, %v82, %v84
    %v86 = vmul.f32 %v24, 0.004057933
    %v87 = vmul.f32 %v24, -0.05108693
    %89 = vrot.lane.b32.xlu0 %v87, 127
    %v90 = vpop.permute.xlu0 %89
    %vm91 = vcmask 1039360
    %v92 = vsel %vm91, %v32, %v90
    %v95 = vadd.f32 %v28, %v92
    %v96 = vadd.f32 %v86, %v90
    %v97 = vmul.f32 %v24, 0.25714523
    %99 = vrot.lane.b32.xlu0 %v97, 126
    %v100 = vpop.permute.xlu0 %99
    %vm101 = vcmask 1031168
    %v102 = vsel %vm101, %v38, %v100
    %v105 = vadd.f32 %v95, %v102
    %v106 = vadd.f32 %v96, %v100
    %v107 = vmul.f32 %v24, 0.8864196
    %109 = vrot.lane.b32.xlu0 %v107, 125
    %v110 = vpop.permute.xlu0 %109
    %vm111 = vcmask 1022976
    %v112 = vsel %vm111, %v44, %v110
    %v115 = vadd.f32 %v105, %v112
    %v116 = vadd.f32 %v106, %v110
    %v117 = vmul.f32 %v24, -0.11531475
    %119 = vrot.lane.b32.xlu0 %v117, 124
    %v120 = vpop.permute.xlu0 %119
    %vm121 = vcmask 1014784
    %v122 = vsel %vm121, %v50, %v120
    %v125 = vadd.f32 %v115, %v122
    %v126 = vadd.f32 %v116, %v120
    %v127 = vmul.f32 %v24, 0.018778928
    %129 = vrot.lane.b32.xlu0 %v127, 123
    %v130 = vpop.permute.xlu0 %129
    %vm131 = vcmask 1006592
    %v132 = vsel %vm131, %v56, %v130
    %v135 = vadd.f32 %v125, %v132
    %v136 = vadd.f32 %v126, %v130
    %vm137 = vcmp.ge.f32.partialorder %v135, 0.0
    %vm138 = vcmp.ge.f32.partialorder %v136, 0.0
    %v139 = vmul.f32 %v135, 0.2
    %v140 = vmul.f32 %v136, 0.2
    %v141 = vsel %vm137, %v135, %v139
    %v142 = vsel %vm138, %v136, %v140
    %vm143 = vcmp.lt.s32.totalorder %v26, 3
    %vm144 = vcmp.lt.s32.totalorder %v27, 3
    %146 = vset.pattern.permute.xlu0 5
    %147 = vperm.xlu0 %146, %v61
    %v148 = vpop.permute.xlu0 %147
    %152 = vrot.lane.b32.xlu0 %v141, 126
    %v153 = vpop.permute.xlu0 %152
    %154 = vrot.lane.b32.xlu0 %v142, 126
    %v155 = vpop.permute.xlu0 %154
    %v156 = vsel %vm101, %v153, %v155
    %v159 = vsel %vm143, %v148, %v156
    %v160 = vsel %vm144, %v148, %v155
    %vm161 = vcmp.ge.s32.totalorder %v26, 19
    %vm162 = vcmp.ge.s32.totalorder %v27, 19
    %164 = vset.pattern.permute.xlu0 21
    %165 = vperm.xlu0 %164, %v85
    %v166 = vpop.permute.xlu0 %165
    %v168 = vsel %vm161, %v166, %v159
    %v169 = vsel %vm162, %v166, %v160
    %v170 = vmul.f32 %v168, 0.009389464
    %v171 = vmul.f32 %v169, 0.009389464
    %v172 = vadd.f32 %v170, 0.0
    %v173 = vadd.f32 %v171, 0.0
    %v174 = vmul.f32 %v168, -0.057657376
    %v175 = vmul.f32 %v169, -0.057657376
    %178 = vrot.lane.b32.xlu0 %v174, 127
    %v179 = vpop.permute.xlu0 %178
    %180 = vrot.lane.b32.xlu0 %v175, 127
    %v181 = vpop.permute.xlu0 %180
    %v182 = vsel %vm91, %v179, %v181
    %v185 = vadd.f32 %v172, %v182
    %v186 = vadd.f32 %v173, %v181
    %v187 = vmul.f32 %v168, 0.4432098
    %v188 = vmul.f32 %v169, 0.4432098
    %191 = vrot.lane.b32.xlu0 %v187, 126
    %v192 = vpop.permute.xlu0 %191
    %193 = vrot.lane.b32.xlu0 %v188, 126
    %v194 = vpop.permute.xlu0 %193
    %v195 = vsel %vm101, %v192, %v194
    %v198 = vadd.f32 %v185, %v195
    %v199 = vadd.f32 %v186, %v194
    %v200 = vmul.f32 %v168, 0.12857261
    %v201 = vmul.f32 %v169, 0.12857261
    %204 = vrot.lane.b32.xlu0 %v200, 125
    %v205 = vpop.permute.xlu0 %204
    %206 = vrot.lane.b32.xlu0 %v201, 125
    %v207 = vpop.permute.xlu0 %206
    %v208 = vsel %vm111, %v205, %v207
    %v211 = vadd.f32 %v198, %v208
    %v212 = vadd.f32 %v199, %v207
    %v213 = vmul.f32 %v168, -0.025543464
    %v214 = vmul.f32 %v169, -0.025543464
    %217 = vrot.lane.b32.xlu0 %v213, 124
    %v218 = vpop.permute.xlu0 %217
    %219 = vrot.lane.b32.xlu0 %v214, 124
    %v220 = vpop.permute.xlu0 %219
    %v221 = vsel %vm121, %v218, %v220
    %v224 = vadd.f32 %v211, %v221
    %v225 = vadd.f32 %v212, %v220
    %v226 = vmul.f32 %v168, 0.0020289666
    %v227 = vmul.f32 %v169, 0.0020289666
    %230 = vrot.lane.b32.xlu0 %v226, 123
    %v231 = vpop.permute.xlu0 %230
    %232 = vrot.lane.b32.xlu0 %v227, 123
    %v233 = vpop.permute.xlu0 %232
    %v234 = vsel %vm131, %v231, %v233
    %v237 = vadd.f32 %v224, %v234
    %v238 = vadd.f32 %v225, %v233
    %239 = vrot.lane.b32.xlu0 %v117, 127
    %v240 = vpop.permute.xlu0 %239
    %v241 = vsel %vm91, %v63, %v240
    %v244 = vadd.f32 %v53, %v241
    %v245 = vadd.f32 %v127, %v240
    %246 = vrot.lane.b32.xlu0 %v107, 126
    %v247 = vpop.permute.xlu0 %246
    %v248 = vsel %vm101, %v67, %v247
    %v251 = vadd.f32 %v244, %v248
    %v252 = vadd.f32 %v245, %v247
    %253 = vrot.lane.b32.xlu0 %v97, 125
    %v254 = vpop.permute.xlu0 %253
    %v255 = vsel %vm111, %v71, %v254
    %v258 = vadd.f32 %v251, %v255
    %v259 = vadd.f32 %v252, %v254
    %260 = vrot.lane.b32.xlu0 %v87, 124
    %v261 = vpop.permute.xlu0 %260
    %v262 = vsel %vm121, %v75, %v261
    %v265 = vadd.f32 %v258, %v262
    %v266 = vadd.f32 %v259, %v261
    %268 = vrot.lane.b32.xlu0 %v86, 123
    %v269 = vpop.permute.xlu0 %268
    %v270 = vsel %vm131, %v80, %v269
    %v273 = vadd.f32 %v265, %v270
    %v274 = vadd.f32 %v266, %v269
    %vm275 = vcmp.ge.f32.partialorder %v273, 0.0
    %vm276 = vcmp.ge.f32.partialorder %v274, 0.0
    %v277 = vmul.f32 %v273, 0.2
    %v278 = vmul.f32 %v274, 0.2
    %v279 = vsel %vm275, %v273, %v277
    %v280 = vsel %vm276, %v274, %v278
    %283 = vrot.lane.b32.xlu0 %v279, 125
    %v284 = vpop.permute.xlu0 %283
    %285 = vrot.lane.b32.xlu0 %v280, 125
    %v286 = vpop.permute.xlu0 %285
    %v287 = vsel %vm111, %v284, %v286
    %v290 = vsel %vm143, %v148, %v287
    %v291 = vsel %vm144, %v148, %v286
    %v292 = vsel %vm161, %v166, %v290
    %v293 = vsel %vm162, %v166, %v291
    %v294 = vmul.f32 %v292, 0.0020289666
    %296 = vrot.lane.b32.xlu0 %v294, 1
    %v297 = vpop.permute.xlu0 %296
    %v299 = vadd.f32 %v237, %v297
    %v300 = vadd.f32 %v238, %v297
    %v301 = vmul.f32 %v292, -0.025543464
    %v302 = vmul.f32 %v293, -0.025543464
    %v303 = vadd.f32 %v299, %v301
    %v304 = vadd.f32 %v300, %v302
    %v305 = vmul.f32 %v292, 0.12857261
    %v306 = vmul.f32 %v293, 0.12857261
    %309 = vrot.lane.b32.xlu0 %v305, 127
    %v310 = vpop.permute.xlu0 %309
    %311 = vrot.lane.b32.xlu0 %v306, 127
    %v312 = vpop.permute.xlu0 %311
    %v313 = vsel %vm91, %v310, %v312
    %v316 = vadd.f32 %v303, %v313
    %v317 = vadd.f32 %v304, %v312
    %v318 = vmul.f32 %v292, 0.4432098
    %v319 = vmul.f32 %v293, 0.4432098
    %322 = vrot.lane.b32.xlu0 %v318, 126
    %v323 = vpop.permute.xlu0 %322
    %324 = vrot.lane.b32.xlu0 %v319, 126
    %v325 = vpop.permute.xlu0 %324
    %v326 = vsel %vm101, %v323, %v325
    %v329 = vadd.f32 %v316, %v326
    %v330 = vadd.f32 %v317, %v325
    %v331 = vmul.f32 %v292, -0.057657376
    %v332 = vmul.f32 %v293, -0.057657376
    %335 = vrot.lane.b32.xlu0 %v331, 125
    %v336 = vpop.permute.xlu0 %335
    %337 = vrot.lane.b32.xlu0 %v332, 125
    %v338 = vpop.permute.xlu0 %337
    %v339 = vsel %vm111, %v336, %v338
    %v342 = vadd.f32 %v329, %v339
    %v343 = vadd.f32 %v330, %v338
    %v344 = vmul.f32 %v292, 0.009389464
    %v345 = vmul.f32 %v293, 0.009389464
    %348 = vrot.lane.b32.xlu0 %v344, 124
    %v349 = vpop.permute.xlu0 %348
    %350 = vrot.lane.b32.xlu0 %v345, 124
    %v351 = vpop.permute.xlu0 %350
    %v352 = vsel %vm121, %v349, %v351
    %v355 = vadd.f32 %v342, %v352
    %v356 = vadd.f32 %v343, %v351
    %359 = vrot.lane.b32.xlu0 %v355, 127
    %v360 = vpop.permute.xlu0 %359
    %361 = vrot.lane.b32.xlu0 %v356, 127
    %v362 = vpop.permute.xlu0 %361
    %v363 = vsel %vm91, %v360, %v362
    %365 = vst [vmem:[#allocation5] sm:$0xff] %v363
    // Predicated region
    $region10: #{tpu_custom_call.1} parent=1 // pred_check
      _
    $region11: #{tpu_custom_call.1} parent=1 // pred_check_branch
      %367 = sbr.rel (0) target = $region13
    $region12: #{tpu_custom_call.1} parent=1 // pred_region
      %369 = vsyncadd [#allocation4], 0
      %s371 = sshll.u32 [#allocation5], 4
      %s372 = int_to_ptr.vmem [resolvable:$true] %s371
      %s373 = sshll.u32 %s1, 4
      %s374 = int_to_ptr.hbm [resolvable:$true] %s373
      %376 = dma.vmem_to_hbm [thread:$0]  %s372, 128, %s374, [#allocation4]
    $region13: #{tpu_custom_call.1} parent=1 // pred_fallthru
      _
    // Predicated region
    $region14: #{tpu_custom_call.1} parent=1 // pred_check
      _
    $region15: #{tpu_custom_call.1} parent=1 // pred_check_branch
      %378 = sbr.rel (0) target = $region17
    $region16: #{tpu_custom_call.1} parent=1 // pred_region
      %380 = dma.done [#allocation4], 128
    $region17: #{tpu_custom_call.1} parent=1 // pred_fallthru
      _
    %381 = vsyncpa [#allocation3], 1
    %382 = vsyncpa [#allocation4], 1

</llo_original>
